<compile_context>
chip_gen: v7x
topology: tpu7x:2x2x1
jax: 0.10.0
libtpu: 0.0.40
codegen_flags: <defaults>
</compile_context>

<pallas_src>
import functools

import jax
import jax.numpy as jnp
from jax.experimental import pallas as pl
from jax.experimental.pallas import tpu as pltpu


def linear_kernel(seq_ref, w_ref, fts_ref):
    # (TM_L, F_in) @ (F_in, F_out): bf16 MXU feed, f32 accumulate, bf16 store.
    fts_ref[...] = jnp.dot(
        seq_ref[...].astype(jnp.bfloat16),
        w_ref[...].astype(jnp.bfloat16),
        preferred_element_type=jnp.float32,
    ).astype(fts_ref.dtype)


def prop_kernel(alpha_ref, adj_ref, fts_ref, bias_ref, out_ref, *, tk, fts_resident):
    k = pl.program_id(1)

    if fts_resident:
        # seq_fts is fully VMEM-resident (DMA'd once); slice the contraction window.
        off = pl.multiple_of(k * tk, tk)
        fts = fts_ref[pl.ds(off, tk), :]
    else:
        fts = fts_ref[...]

    # adj streamed as f32 from HBM, cast to bf16 on the fly for the MXU feed
    # (avoids a separate wrapper-level cast pass over the whole N x N matrix).
    partial = jnp.dot(
        adj_ref[...].astype(jnp.bfloat16), fts, preferred_element_type=jnp.float32
    )

    # Output block is resident across the k (reduction) axis -> use it as the
    # f32 accumulator directly (no VMEM scratch needed).
    @pl.when(k == 0)
    def _first():
        out_ref[...] = partial

    @pl.when(k > 0)
    def _accum():
        out_ref[...] += partial

    @pl.when(k == pl.num_programs(1) - 1)
    def _epilogue():
        out = out_ref[...] + bias_ref[...]          # f32 epilogue
        alpha = alpha_ref[0, 0]
        out_ref[...] = jnp.where(out > 0, out, alpha * out)


def _round_up(x, m):
    return ((x + m - 1) // m) * m


def _pick_tile(n, preferred, minimum=256):
    """Largest tile in {preferred, preferred/2, ..., minimum} dividing n."""
    t = preferred
    while t > minimum and n % t:
        t //= 2
    return min(t, n)


def gcn_forward(seq, adj, w, bias, alpha, *, tile=512,
                max_resident_fts_bytes=8 * 1024 * 1024):
    """seq: (1, N, F_in) f32, adj: (N, N) f32, w: (F_in, F_out) f32,
    bias: (F_out,) f32, alpha: scalar f32.  Returns (1, N, F_out) f32."""
    seq2d = jnp.squeeze(seq, 0)                      # (N, F_in)
    N, f_in = seq2d.shape
    f_out = w.shape[1]

    # Pad node count to a multiple of 256 with zero rows/cols so 256/512 tiles
    # always divide it (Cora 2708 -> 2816, Pubmed 19717 -> 19968).  Zero padding
    # contributes nothing to valid output rows; padded rows are sliced off.
    n_pad = _round_up(N, 256)
    pad = n_pad - N
    if pad:
        seq2d = jnp.pad(seq2d, ((0, pad), (0, 0)))
        adj = jnp.pad(adj, ((0, pad), (0, pad)))

    tk = _pick_tile(n_pad, tile)                     # contraction tile
    tm = _pick_tile(n_pad, tile)                     # output row tile
    if n_pad // tm < 2 and tm >= 512:
        tm //= 2                                     # >=2 parallel blocks (v7x megacore)
    tml = _pick_tile(n_pad, tile)                    # linear row tile

    bias2d = bias.reshape(1, f_out).astype(jnp.float32)
    alpha2d = jnp.asarray(alpha, jnp.float32).reshape(1, 1)

    vmem_limit = 48 * 1024 * 1024                    # fits v7x's 64 MiB with headroom

    # ---- 1) Linear: seq_fts = seq @ W (computed once, stored bf16) -------------
    lin_cost = pl.CostEstimate(
        flops=2 * n_pad * f_in * f_out,
        transcendentals=0,
        bytes_accessed=n_pad * f_in * 4 + f_in * f_out * 4 + n_pad * f_out * 2,
    )
    seq_fts = pl.pallas_call(
        linear_kernel,
        out_shape=jax.ShapeDtypeStruct((n_pad, f_out), jnp.bfloat16),
        grid=(n_pad // tml,),
        in_specs=[
            pl.BlockSpec((tml, f_in), lambda i: (i, 0)),       # seq row tile
            pl.BlockSpec((f_in, f_out), lambda i: (0, 0)),     # full W (small)
        ],
        out_specs=pl.BlockSpec((tml, f_out), lambda i: (i, 0)),
        compiler_params=pltpu.CompilerParams(
            dimension_semantics=("parallel",),
            vmem_limit_bytes=vmem_limit,
        ),
        cost_estimate=lin_cost,
    )(seq2d, w)

    # ---- 2) Propagation: out = PReLU(adj @ seq_fts + bias) ---------------------
    # Keep seq_fts VMEM-resident when it comfortably fits (x2 buffer headroom);
    # otherwise stream (tk, f_out) tiles along the contraction axis.
    fts_resident = (n_pad * f_out * 2) * 2 <= max_resident_fts_bytes
    if fts_resident:
        fts_spec = pl.BlockSpec((n_pad, f_out), lambda i, k: (0, 0))
    else:
        fts_spec = pl.BlockSpec((tk, f_out), lambda i, k: (k, 0))

    prop_cost = pl.CostEstimate(
        flops=2 * n_pad * n_pad * f_out,
        transcendentals=0,
        bytes_accessed=n_pad * n_pad * 4 + n_pad * f_out * 2
        + n_pad * f_out * 4 + f_out * 4,
    )
    out2d = pl.pallas_call(
        functools.partial(prop_kernel, tk=tk, fts_resident=fts_resident),
        out_shape=jax.ShapeDtypeStruct((n_pad, f_out), jnp.float32),
        grid=(n_pad // tm, n_pad // tk),
        in_specs=[
            pl.BlockSpec(memory_space=pltpu.SMEM),                  # alpha (scalar)
            pl.BlockSpec((tm, tk), lambda i, k: (i, k)),            # adj tile (f32)
            fts_spec,                                               # seq_fts (bf16)
            pl.BlockSpec((1, f_out), lambda i, k: (0, 0)),          # bias
        ],
        out_specs=pl.BlockSpec((tm, f_out), lambda i, k: (i, 0)),   # acc == output
        compiler_params=pltpu.CompilerParams(
            dimension_semantics=("parallel", "arbitrary"),
            vmem_limit_bytes=vmem_limit,
        ),
        cost_estimate=prop_cost,
    )(alpha2d, adj, seq_fts, bias2d)

    if pad:
        out2d = out2d[:N]
    return jnp.expand_dims(out2d, 0)                 # (1, N, F_out)


def init_params(key, in_ft, out_ft):
    # Xavier-uniform Linear weight (matches torch.nn.init.xavier_uniform_),
    # zero bias, PReLU alpha = 0.25 (PyTorch default).
    bound = (6.0 / (in_ft + out_ft)) ** 0.5
    w_torch_layout = jax.random.uniform(
        key, (out_ft, in_ft), minval=-bound, maxval=bound, dtype=jnp.float32
    )
    w = w_torch_layout.T                             # (in_ft, out_ft) for x @ W
    bias = jnp.zeros((out_ft,), jnp.float32)
    alpha = jnp.float32(0.25)
    return w, bias, alpha


if __name__ == "__main__":
    key = jax.random.PRNGKey(0)
    k_w, k_seq, k_adj = jax.random.split(key, 3)

    # Non-256-divisible node count exercises the padding path (640 -> 768, grid 3x3).
    N, in_ft, out_ft = 640, 256, 128

    w, bias, alpha = init_params(k_w, in_ft, out_ft)
    seq = jax.random.normal(k_seq, (1, N, in_ft), dtype=jnp.float32)

    # Deterministic symmetric row-normalized adjacency (dense stand-in for sparse).
    a = (jax.random.uniform(k_adj, (N, N)) > 0.9).astype(jnp.float32)
    a = jnp.maximum(a, a.T) + jnp.eye(N, dtype=jnp.float32)
    adj = a / jnp.sum(a, axis=1, keepdims=True)

    seq2d = jnp.squeeze(seq, 0)
    hi = jax.lax.Precision.HIGHEST
    bf = jnp.bfloat16

    # Reference with matching bf16 MXU feeds (tight check on the kernel plumbing).
    fts_bf = jnp.matmul(
        seq2d.astype(bf).astype(jnp.float32), w.astype(bf).astype(jnp.float32),
        precision=hi,
    ).astype(bf).astype(jnp.float32)
    prop_bf = jnp.matmul(adj.astype(bf).astype(jnp.float32), fts_bf, precision=hi) + bias
    ref_bf = jnp.where(prop_bf > 0, prop_bf, alpha * prop_bf)[None]

    # Full-precision reference (loose check on overall semantics incl. bf16 casts).
    prop_f32 = jnp.matmul(adj, jnp.matmul(seq2d, w, precision=hi), precision=hi) + bias
    ref_f32 = jnp.where(prop_f32 > 0, prop_f32, alpha * prop_f32)[None]

    # Run both seq_fts paths: VMEM-resident (default) and streaming.
    for kwargs in ({}, {"max_resident_fts_bytes": 0}):
        out = gcn_forward(seq, adj, w, bias, alpha, **kwargs)
        jax.block_until_ready(out)
        assert out.shape == (1, N, out_ft)
        assert jnp.allclose(out, ref_bf, atol=5e-3, rtol=5e-2), (
            f"bf16-consistent mismatch ({kwargs}), max abs err "
            f"{float(jnp.max(jnp.abs(out - ref_bf)))}"
        )
        assert jnp.allclose(out, ref_f32, atol=3e-2, rtol=3e-2), (
            f"f32 reference mismatch ({kwargs}), max abs err "
            f"{float(jnp.max(jnp.abs(out - ref_f32)))}"
        )

    print("KERNEL_OK")
</pallas_src>

<mosaic_0001>
module attributes {stable_mosaic.version = 11 : i64} {
  func.func @linear_kernel(%arg0: i32, %arg1: memref<256x256xf32, #tpu.memory_space<vmem>>, %arg2: memref<256x128xf32, #tpu.memory_space<vmem>>, %arg3: memref<256x128xbf16, #tpu.memory_space<vmem>>) attributes {dimension_semantics = [#tpu.dimension_semantics<parallel>], iteration_bounds = array<i64: 3>, scalar_prefetch = 0 : i64, scratch_operands = 0 : i64, tpu.core_type = #tpu.core_type<tc>, window_params = [{transform_indices = @transform_0, window_bounds = array<i64: 256, 256>}, {pipeline_mode = #tpu.pipeline_mode<synchronous>, transform_indices = @transform_1, window_bounds = array<i64: 256, 128>}, {transform_indices = @transform_2, window_bounds = array<i64: 256, 128>}]} {
    %c0 = arith.constant 0 : index
    %c0_0 = arith.constant 0 : index
    %0 = vector.load %arg1[%c0, %c0_0] : memref<256x256xf32, #tpu.memory_space<vmem>>, vector<256x256xf32>
    %1 = arith.truncf %0 : vector<256x256xf32> to vector<256x256xbf16>
    %c0_1 = arith.constant 0 : index
    %c0_2 = arith.constant 0 : index
    %2 = vector.load %arg2[%c0_1, %c0_2] : memref<256x128xf32, #tpu.memory_space<vmem>>, vector<256x128xf32>
    %3 = arith.truncf %2 : vector<256x128xf32> to vector<256x128xbf16>
    %cst = arith.constant dense<0.000000e+00> : vector<256x128xf32>
    %4 = tpu.matmul %1, %3, %cst {dimension_numbers = #tpu.dot_dimension_numbers<[1], [0], [0], [1], [0, 0, 1, 1], [], []>} : vector<256x256xbf16>, vector<256x128xbf16>, vector<256x128xf32> -> vector<256x128xf32>
    %5 = arith.truncf %4 : vector<256x128xf32> to vector<256x128xbf16>
    %c0_3 = arith.constant 0 : index
    %c0_4 = arith.constant 0 : index
    %6 = vector.load %arg3[%c0_3, %c0_4] : memref<256x128xbf16, #tpu.memory_space<vmem>>, vector<256x128xbf16>
    tpu.vector_store %arg3[%c0_3, %c0_4], %5 {strides = array<i32>} : memref<256x128xbf16, #tpu.memory_space<vmem>>, vector<256x128xbf16>,
    return
  }
  func.func @transform_0(%arg0: i32) -> (i32, i32) {
    %c0_i32 = arith.constant 0 : i32
    %c0_i32_0 = arith.constant 0 : i32
    return %arg0, %c0_i32 : i32, i32
  }
  func.func @transform_1(%arg0: i32) -> (i32, i32) {
    %c0_i32 = arith.constant 0 : i32
    %c0_i32_0 = arith.constant 0 : i32
    %c0_i32_1 = arith.constant 0 : i32
    return %c0_i32, %c0_i32_0 : i32, i32
  }
  func.func @transform_2(%arg0: i32) -> (i32, i32) {
    %c0_i32 = arith.constant 0 : i32
    %c0_i32_0 = arith.constant 0 : i32
    return %arg0, %c0_i32 : i32, i32
  }
}

</mosaic_0001>

<llo_original>
// kernel: tpu_custom_call.1
$region0: #{tpu_custom_call.1}
  #allocation0 [shape = 'u32[]', space=smem, size = 0x4, offset = 0x4, fixed_abs, tag = 'smem constant byte address 0x4 - core index']
  #allocation1 [shape = 'u32[144,128]{1,0:T(1,128)}', space=vmem, size = 0x12000, scoped, tag = 'internal scratch']
  %s0 = inlined_call_operand.hbm [shape: f32[768,256], index: 0, kind: input, shape index: {}]
  %s1 = inlined_call_operand.hbm [shape: f32[256,128], index: 1, kind: input, shape index: {}]
  %s2 = inlined_call_operand.hbm [shape: bf16[768,128], index: 2, kind: output, shape index: {}]
  %s3 = sld [smem:[#allocation0]]
  $region49: #{tpu_custom_call.1} parent=0
    _
  %s5 = ssub.s32 1, %s3
  %s6 = scalar_select 0, %s5, %s3
  $region1: #{tpu_custom_call.1} parent=0
    #allocation2 [shape = 'u8[524288]{0}', space=vmem, size = 0x80000, scoped, tag = 'input window, operand 0']
    #allocation3 [shape = 's32[2]{0}', space=sflag, size = 0x8, scoped, tag = 'scoped memory for tpu_custom_call.1']
    #allocation4 [shape = 's32[2]{0}', space=sflag, size = 0x8, scoped, tag = 'scoped memory for tpu_custom_call.1']
    #allocation5 [shape = 'u8[131072]{0}', space=vmem, size = 0x20000, scoped, tag = 'input window, operand 1, single buffered']
    #allocation6 [shape = 's32[1]{0}', space=sflag, size = 0x4, scoped, tag = 'scoped memory for tpu_custom_call.1']
    #allocation7 [shape = 'u8[131072]{0}', space=vmem, size = 0x20000, scoped, tag = 'output window, operand 0']
    %7 = vsyncpa [#allocation3], 0
    %s8 = scalar_lea.sflag [#allocation3], 1
    %9 = vsyncpa %s8, 0
    %10 = vsyncpa [#allocation6], 0
    %11 = vsyncpa [#allocation4], 0
    %s12 = scalar_lea.sflag [#allocation4], 1
    %13 = vsyncpa %s12, 0
    loop: start=0, step=1, limit=5
    $region2: #{tpu_custom_call.1} parent=1 // loop_pre_header
      _
    $region3: #{tpu_custom_call.1} parent=1 // loop_header
      %s15 = sphi 0, %s19
      %p16 = scmp.ge.s32.totalorder %s15, 5
      %s25 = sphi 0, %s27
      %s28 = sphi 0, %s25
      %s29 = sphi 0, %s28
      %s45 = sphi 0, %s29
      %s49 = sphi 0, %s49
      %s51 = sphi 0, %s49
      %s52 = sphi 0, %s51
      %s66 = sphi 0, %s52
      %s72 = sphi 0, %s74
      %s75 = sphi 0, %s72
      %s76 = sphi 0, %s75
      %s92 = sphi 0, %s76
    $region4: #{tpu_custom_call.1} parent=1 // loop_header_branch
      %18 = sbr.rel (%p16) target = $region8
    $region5: #{tpu_custom_call.1} parent=1 // loop_body
      %s20 = ssub.s32 %s15, 1
      %s21 = ssub.s32 %s15, 2
      %s22 = sadd.s32 %s15, 1
      %s23 = ssub.s32 %s15, %s22
      %p24 = scmp.eq.s32.totalorder %s23, 0
      %s26 = sadd.s32 %s25, 1
      %s27 = scalar_select %p24, %s25, %s26
      %p30 = pneg %p24
      %p31 = scmp.eq.s32.totalorder %s15, 2
      %p32 = por %p30, %p31
      %p33 = scmp.ne.s32.totalorder %s25, %s28
      %p34 = scmp.eq.s32.totalorder %s15, 0
      %p35 = por %p33, %p34
      %p36 = scmp.ne.s32.totalorder %s25, %s28
      %p37 = scmp.eq.s32.totalorder %s20, 2
      %p38 = por %p36, %p37
      %p39 = scmp.ne.s32.totalorder %s28, %s29
      %p40 = scmp.eq.s32.totalorder %s20, 0
      %p41 = por %p39, %p40
      %p42 = scmp.ne.s32.totalorder %s28, %s29
      %p43 = scmp.eq.s32.totalorder %s21, 2
      %p44 = por %p42, %p43
      %p46 = scmp.ne.s32.totalorder %s29, %s45
      %p47 = scmp.eq.s32.totalorder %s21, 0
      %p48 = por %p46, %p47
      %s50 = sadd.s32 %s49, 1
      %p53 = scmp.eq.s32.totalorder %s15, 2
      %p54 = scmp.ne.s32.totalorder %s49, %s51
      %p55 = scmp.eq.s32.totalorder %s15, 0
      %p56 = por %p54, %p55
      %p57 = scmp.ne.s32.totalorder %s49, %s51
      %p58 = scmp.eq.s32.totalorder %s20, 2
      %p59 = por %p57, %p58
      %p60 = scmp.ne.s32.totalorder %s51, %s52
      %p61 = scmp.eq.s32.totalorder %s20, 0
      %p62 = por %p60, %p61
      %p63 = scmp.ne.s32.totalorder %s51, %s52
      %p64 = scmp.eq.s32.totalorder %s21, 2
      %p65 = por %p63, %p64
      %p67 = scmp.ne.s32.totalorder %s52, %s66
      %p68 = scmp.eq.s32.totalorder %s21, 0
      %p69 = por %p67, %p68
      %s70 = ssub.s32 %s15, %s22
      %p71 = scmp.eq.s32.totalorder %s70, 0
      %s73 = sadd.s32 %s72, 1
      %s74 = scalar_select %p71, %s72, %s73
      %p77 = pneg %p71
      %p78 = scmp.eq.s32.totalorder %s15, 2
      %p79 = por %p77, %p78
      %p80 = scmp.ne.s32.totalorder %s72, %s75
      %p81 = scmp.eq.s32.totalorder %s15, 0
      %p82 = por %p80, %p81
      %p83 = scmp.ne.s32.totalorder %s72, %s75
      %p84 = scmp.eq.s32.totalorder %s20, 2
      %p85 = por %p83, %p84
      %p86 = scmp.ne.s32.totalorder %s75, %s76
      %p87 = scmp.eq.s32.totalorder %s20, 0
      %p88 = por %p86, %p87
      %p89 = scmp.ne.s32.totalorder %s75, %s76
      %p90 = scmp.eq.s32.totalorder %s21, 2
      %p91 = por %p89, %p90
      %p93 = scmp.ne.s32.totalorder %s76, %s92
      %p94 = scmp.eq.s32.totalorder %s21, 0
      %p95 = por %p93, %p94
      %p96 = scmp.le.s32.totalorder 1, %s15
      %p97 = scmp.lt.s32.totalorder %s15, 4
      %p98 = pnand %p96, %p97
      %p99 = pneg %p98
      // Predicated region
      $region9: #{tpu_custom_call.1} parent=5 // pred_check
        _
      $region10: #{tpu_custom_call.1} parent=5 // pred_check_branch
        %101 = sbr.rel (%p98) target = $region12
      $region11: #{tpu_custom_call.1} parent=5 // pred_region
        %s102 = ssub.s32 %s15, 1
        // Predicated region
        $region13: #{tpu_custom_call.1} parent=11 // pred_check
          %p103 = pneg %p62
        $region14: #{tpu_custom_call.1} parent=11 // pred_check_branch
          %105 = sbr.rel (%p103) target = $region16
        $region15: #{tpu_custom_call.1} parent=11 // pred_region
          %s107 = ssub.s32 4096, 4096
          %108 = vsyncadd [#allocation6], %s107
          %s109 = sshll.u32 [#allocation5], 4
          %s110 = int_to_ptr.vmem [resolvable:$true] %s109
          %115 = dma.hbm_to_vmem [thread:$0]  %s1, 4096, %s110, [#allocation6], 128, 128, 8
        $region16: #{tpu_custom_call.1} parent=11 // pred_fallthru
          _
      $region12: #{tpu_custom_call.1} parent=5 // pred_fallthru
        _
      %p116 = scmp.lt.s32.totalorder %s15, 3
      // Predicated region
      $region17: #{tpu_custom_call.1} parent=5 // pred_check
        %p117 = pneg %p116
      $region18: #{tpu_custom_call.1} parent=5 // pred_check_branch
        %119 = sbr.rel (%p117) target = $region20
      $region19: #{tpu_custom_call.1} parent=5 // pred_region
        // Predicated region
        $region21: #{tpu_custom_call.1} parent=19 // pred_check
          %p120 = pneg %p35
        $region22: #{tpu_custom_call.1} parent=19 // pred_check_branch
          %122 = sbr.rel (%p120) target = $region24
        $region23: #{tpu_custom_call.1} parent=19 // pred_region
          %s123 = sand.u32 %s25, 1
          %s124 = scalar_lea.sflag [#allocation3], %s123
          %s125 = sand.u32 %s25, 1
          %s126 = smul.addr %s125, 512
          %s127 = scalar_lea.vmem [#allocation2], %s126
          %s128 = smul.u32 32, %s15
          %s130 = ssub.s32 8192, 8192
          %131 = vsyncadd %s124, %s130
          %s132 = smul.addr %s128, 2
          %s133 = smul.addr %s132, 128
          %s134 = scalar_lea.hbm %s0, %s133
          %s135 = sshll.u32 %s127, 4
          %s136 = int_to_ptr.vmem [resolvable:$true] %s135
          %141 = dma.hbm_to_vmem [thread:$0]  %s134, 8192, %s136, %s124, 256, 256, 16
        $region24: #{tpu_custom_call.1} parent=19 // pred_fallthru
          _
      $region20: #{tpu_custom_call.1} parent=5 // pred_fallthru
        _
      %p142 = scmp.le.s32.totalorder 1, %s15
      %p143 = scmp.lt.s32.totalorder %s15, 4
      %p144 = pnand %p142, %p143
      %p145 = pneg %p144
      // Predicated region
      $region25: #{tpu_custom_call.1} parent=5 // pred_check
        _
      $region26: #{tpu_custom_call.1} parent=5 // pred_check_branch
        %147 = sbr.rel (%p144) target = $region28
      $region27: #{tpu_custom_call.1} parent=5 // pred_region
        %s148 = ssub.s32 %s15, 1
        %s149 = sand.u32 %s28, 1
        %s150 = scalar_lea.sflag [#allocation3], %s149
        %s151 = sand.u32 %s28, 1
        %s152 = smul.addr %s151, 512
        %s153 = scalar_lea.vmem [#allocation2], %s152
        // Predicated region
        $region29: #{tpu_custom_call.1} parent=27 // pred_check
          %p154 = pneg %p41
        $region30: #{tpu_custom_call.1} parent=27 // pred_check_branch
          %156 = sbr.rel (%p154) target = $region32
        $region31: #{tpu_custom_call.1} parent=27 // pred_region
          %157 = dma.done %s150, 8192
        $region32: #{tpu_custom_call.1} parent=27 // pred_fallthru
          _
        // Predicated region
        $region33: #{tpu_custom_call.1} parent=27 // pred_check
          %p158 = pneg %p62
        $region34: #{tpu_custom_call.1} parent=27 // pred_check_branch
          %160 = sbr.rel (%p158) target = $region36
        $region35: #{tpu_custom_call.1} parent=27 // pred_region
          %161 = dma.done [#allocation6], 4096
        $region36: #{tpu_custom_call.1} parent=27 // pred_fallthru
          _
        %s162 = sand.u32 %s28, 1
        %s163 = scalar_lea.sflag [#allocation3], %s162
        %s164 = sand.u32 %s28, 1
        %s165 = smul.addr %s164, 512
        %s166 = scalar_lea.vmem [#allocation2], %s165
        %p167 = pneg %p41
        %p168 = pneg %p38
        %p169 = pneg %p62
        %p170 = pneg %p59
        %p171 = pneg %p88
        %p172 = pneg %p85
        %s173 = sand.u32 %s75, 1
        %s174 = scalar_lea.sflag [#allocation4], %s173
        %s175 = sand.u32 %s75, 1
        %s176 = smul.addr %s175, 128
        %s177 = scalar_lea.vmem [#allocation7], %s176
        %s178 = smul.u32 32, %s20
        %s179 = smul.u32 32, %s20
        %v181 = vld [vmem:[%s153] sm:$0xff]
        %v182 = vld [vmem:[%s153 + $0x8] sm:$0xff]
        %v183 = vld [vmem:[%s153 + $0x10] sm:$0xff]
        %v184 = vld [vmem:[%s153 + $0x18] sm:$0xff]
        %v185 = vld [vmem:[%s153 + $0x20] sm:$0xff]
        %v186 = vld [vmem:[%s153 + $0x28] sm:$0xff]
        %v187 = vld [vmem:[%s153 + $0x30] sm:$0xff]
        %v188 = vld [vmem:[%s153 + $0x38] sm:$0xff]
        %v189 = vld [vmem:[%s153 + $0x40] sm:$0xff]
        %v190 = vld [vmem:[%s153 + $0x48] sm:$0xff]
        %v191 = vld [vmem:[%s153 + $0x50] sm:$0xff]
        %v192 = vld [vmem:[%s153 + $0x58] sm:$0xff]
        %v193 = vld [vmem:[%s153 + $0x60] sm:$0xff]
        %v194 = vld [vmem:[%s153 + $0x68] sm:$0xff]
        %v195 = vld [vmem:[%s153 + $0x70] sm:$0xff]
        %v196 = vld [vmem:[%s153 + $0x78] sm:$0xff]
        %v197 = vld [vmem:[%s153 + $0x80] sm:$0xff]
        %v198 = vld [vmem:[%s153 + $0x88] sm:$0xff]
        %v199 = vld [vmem:[%s153 + $0x90] sm:$0xff]
        %v200 = vld [vmem:[%s153 + $0x98] sm:$0xff]
        %v201 = vld [vmem:[%s153 + $0xa0] sm:$0xff]
        %v202 = vld [vmem:[%s153 + $0xa8] sm:$0xff]
        %v203 = vld [vmem:[%s153 + $0xb0] sm:$0xff]
        %v204 = vld [vmem:[%s153 + $0xb8] sm:$0xff]
        %v205 = vld [vmem:[%s153 + $0xc0] sm:$0xff]
        %v206 = vld [vmem:[%s153 + $0xc8] sm:$0xff]
        %v207 = vld [vmem:[%s153 + $0xd0] sm:$0xff]
        %v208 = vld [vmem:[%s153 + $0xd8] sm:$0xff]
        %v209 = vld [vmem:[%s153 + $0xe0] sm:$0xff]
        %v210 = vld [vmem:[%s153 + $0xe8] sm:$0xff]
        %v211 = vld [vmem:[%s153 + $0xf0] sm:$0xff]
        %v212 = vld [vmem:[%s153 + $0xf8] sm:$0xff]
        %v213 = vld [vmem:[%s153 + $0x100] sm:$0xff]
        %v214 = vld [vmem:[%s153 + $0x108] sm:$0xff]
        %v215 = vld [vmem:[%s153 + $0x110] sm:$0xff]
        %v216 = vld [vmem:[%s153 + $0x118] sm:$0xff]
        %v217 = vld [vmem:[%s153 + $0x120] sm:$0xff]
        %v218 = vld [vmem:[%s153 + $0x128] sm:$0xff]
        %v219 = vld [vmem:[%s153 + $0x130] sm:$0xff]
        %v220 = vld [vmem:[%s153 + $0x138] sm:$0xff]
        %v221 = vld [vmem:[%s153 + $0x140] sm:$0xff]
        %v222 = vld [vmem:[%s153 + $0x148] sm:$0xff]
        %v223 = vld [vmem:[%s153 + $0x150] sm:$0xff]
        %v224 = vld [vmem:[%s153 + $0x158] sm:$0xff]
        %v225 = vld [vmem:[%s153 + $0x160] sm:$0xff]
        %v226 = vld [vmem:[%s153 + $0x168] sm:$0xff]
        %v227 = vld [vmem:[%s153 + $0x170] sm:$0xff]
        %v228 = vld [vmem:[%s153 + $0x178] sm:$0xff]
        %v229 = vld [vmem:[%s153 + $0x180] sm:$0xff]
        %v230 = vld [vmem:[%s153 + $0x188] sm:$0xff]
        %v231 = vld [vmem:[%s153 + $0x190] sm:$0xff]
        %v232 = vld [vmem:[%s153 + $0x198] sm:$0xff]
        %v233 = vld [vmem:[%s153 + $0x1a0] sm:$0xff]
        %v234 = vld [vmem:[%s153 + $0x1a8] sm:$0xff]
        %v235 = vld [vmem:[%s153 + $0x1b0] sm:$0xff]
        %v236 = vld [vmem:[%s153 + $0x1b8] sm:$0xff]
        %v237 = vld [vmem:[%s153 + $0x1c0] sm:$0xff]
        %v238 = vld [vmem:[%s153 + $0x1c8] sm:$0xff]
        %v239 = vld [vmem:[%s153 + $0x1d0] sm:$0xff]
        %v240 = vld [vmem:[%s153 + $0x1d8] sm:$0xff]
        %v241 = vld [vmem:[%s153 + $0x1e0] sm:$0xff]
        %v242 = vld [vmem:[%s153 + $0x1e8] sm:$0xff]
        %v243 = vld [vmem:[%s153 + $0x1f0] sm:$0xff]
        %v244 = vld [vmem:[%s153 + $0x1f8] sm:$0xff]
        %v245 = vpack.c.bf16 %v183, %v181
        %v246 = vpack.c.bf16 %v184, %v182
        %v247 = vpack.c.bf16 %v187, %v185
        %v248 = vpack.c.bf16 %v188, %v186
        %v249 = vpack.c.bf16 %v191, %v189
        %v250 = vpack.c.bf16 %v192, %v190
        %v251 = vpack.c.bf16 %v195, %v193
        %v252 = vpack.c.bf16 %v196, %v194
        %v253 = vpack.c.bf16 %v199, %v197
        %v254 = vpack.c.bf16 %v200, %v198
        %v255 = vpack.c.bf16 %v203, %v201
        %v256 = vpack.c.bf16 %v204, %v202
        %v257 = vpack.c.bf16 %v207, %v205
        %v258 = vpack.c.bf16 %v208, %v206
        %v259 = vpack.c.bf16 %v211, %v209
        %v260 = vpack.c.bf16 %v212, %v210
        %v261 = vpack.c.bf16 %v215, %v213
        %v262 = vpack.c.bf16 %v216, %v214
        %v263 = vpack.c.bf16 %v219, %v217
        %v264 = vpack.c.bf16 %v220, %v218
        %v265 = vpack.c.bf16 %v223, %v221
        %v266 = vpack.c.bf16 %v224, %v222
        %v267 = vpack.c.bf16 %v227, %v225
        %v268 = vpack.c.bf16 %v228, %v226
        %v269 = vpack.c.bf16 %v231, %v229
        %v270 = vpack.c.bf16 %v232, %v230
        %v271 = vpack.c.bf16 %v235, %v233
        %v272 = vpack.c.bf16 %v236, %v234
        %v273 = vpack.c.bf16 %v239, %v237
        %v274 = vpack.c.bf16 %v240, %v238
        %v275 = vpack.c.bf16 %v243, %v241
        %v276 = vpack.c.bf16 %v244, %v242
        %v277 = vld [vmem:[#allocation5] sm:$0xff]
        %v278 = vld [vmem:[#allocation5 + $0x8] sm:$0xff]
        %v279 = vld [vmem:[#allocation5 + $0x10] sm:$0xff]
        %v280 = vld [vmem:[#allocation5 + $0x18] sm:$0xff]
        %v281 = vld [vmem:[#allocation5 + $0x20] sm:$0xff]
        %v282 = vld [vmem:[#allocation5 + $0x28] sm:$0xff]
        %v283 = vld [vmem:[#allocation5 + $0x30] sm:$0xff]
        %v284 = vld [vmem:[#allocation5 + $0x38] sm:$0xff]
        %v285 = vld [vmem:[#allocation5 + $0x40] sm:$0xff]
        %v286 = vld [vmem:[#allocation5 + $0x48] sm:$0xff]
        %v287 = vld [vmem:[#allocation5 + $0x50] sm:$0xff]
        %v288 = vld [vmem:[#allocation5 + $0x58] sm:$0xff]
        %v289 = vld [vmem:[#allocation5 + $0x60] sm:$0xff]
        %v290 = vld [vmem:[#allocation5 + $0x68] sm:$0xff]
        %v291 = vld [vmem:[#allocation5 + $0x70] sm:$0xff]
        %v292 = vld [vmem:[#allocation5 + $0x78] sm:$0xff]
        %v293 = vld [vmem:[#allocation5 + $0x80] sm:$0xff]
        %v294 = vld [vmem:[#allocation5 + $0x88] sm:$0xff]
        %v295 = vld [vmem:[#allocation5 + $0x90] sm:$0xff]
        %v296 = vld [vmem:[#allocation5 + $0x98] sm:$0xff]
        %v297 = vld [vmem:[#allocation5 + $0xa0] sm:$0xff]
        %v298 = vld [vmem:[#allocation5 + $0xa8] sm:$0xff]
        %v299 = vld [vmem:[#allocation5 + $0xb0] sm:$0xff]
        %v300 = vld [vmem:[#allocation5 + $0xb8] sm:$0xff]
        %v301 = vld [vmem:[#allocation5 + $0xc0] sm:$0xff]
        %v302 = vld [vmem:[#allocation5 + $0xc8] sm:$0xff]
        %v303 = vld [vmem:[#allocation5 + $0xd0] sm:$0xff]
        %v304 = vld [vmem:[#allocation5 + $0xd8] sm:$0xff]
        %v305 = vld [vmem:[#allocation5 + $0xe0] sm:$0xff]
        %v306 = vld [vmem:[#allocation5 + $0xe8] sm:$0xff]
        %v307 = vld [vmem:[#allocation5 + $0xf0] sm:$0xff]
        %v308 = vld [vmem:[#allocation5 + $0xf8] sm:$0xff]
        %v309 = vpack.c.bf16 %v278, %v277
        %v310 = vpack.c.bf16 %v280, %v279
        %v311 = vpack.c.bf16 %v282, %v281
        %v312 = vpack.c.bf16 %v284, %v283
        %v313 = vpack.c.bf16 %v286, %v285
        %v314 = vpack.c.bf16 %v288, %v287
        %v315 = vpack.c.bf16 %v290, %v289
        %v316 = vpack.c.bf16 %v292, %v291
        %v317 = vpack.c.bf16 %v294, %v293
        %v318 = vpack.c.bf16 %v296, %v295
        %v319 = vpack.c.bf16 %v298, %v297
        %v320 = vpack.c.bf16 %v300, %v299
        %v321 = vpack.c.bf16 %v302, %v301
        %v322 = vpack.c.bf16 %v304, %v303
        %v323 = vpack.c.bf16 %v306, %v305
        %v324 = vpack.c.bf16 %v308, %v307
        %325 = vmatprep.subr.bf16.mxu0 0
        %326 = vmatpush1.bf16.msra.mxu0 %v309
        %327 = vmatprep.subr.bf16.mxu0 0
        %328 = vmatpush1.bf16.msra.mxu0 %v310
        %329 = vmatprep.subr.bf16.mxu0 0
        %330 = vmatpush1.bf16.msra.mxu0 %v311
        %331 = vmatprep.subr.bf16.mxu0 0
        %332 = vmatpush1.bf16.msra.mxu0 %v312
        %333 = vmatprep.subr.bf16.mxu0 0
        %334 = vmatpush1.bf16.msra.mxu0 %v313
        %335 = vmatprep.subr.bf16.mxu0 0
        %336 = vmatpush1.bf16.msra.mxu0 %v314
        %337 = vmatprep.subr.bf16.mxu0 0
        %338 = vmatpush1.bf16.msra.mxu0 %v315
        %339 = vmatprep.subr.bf16.mxu0 0
        %340 = vmatpush1.bf16.msra.mxu0 %v316
        %341 = vmatprep.subr.bf16.mxu0 0
        %342 = vmatpush1.bf16.msra.mxu0 %v317
        %343 = vmatprep.subr.bf16.mxu0 0
        %344 = vmatpush1.bf16.msra.mxu0 %v318
        %345 = vmatprep.subr.bf16.mxu0 0
        %346 = vmatpush1.bf16.msra.mxu0 %v319
        %347 = vmatprep.subr.bf16.mxu0 0
        %348 = vmatpush1.bf16.msra.mxu0 %v320
        %349 = vmatprep.subr.bf16.mxu0 0
        %350 = vmatpush1.bf16.msra.mxu0 %v321
        %351 = vmatprep.subr.bf16.mxu0 0
        %352 = vmatpush1.bf16.msra.mxu0 %v322
        %353 = vmatprep.subr.bf16.mxu0 0
        %354 = vmatpush1.bf16.msra.mxu0 %v323
        %355 = vmatprep.subr.bf16.mxu0 0
        %356 = vmatpush1.bf16.msra.mxu0 %v324
        %357 = vmatprep.mubr.bf16.mxu0 %v246
        %358 = vmatmul.mubr.bf16.gmra.mrb[0].mxu0 %v245
        %v359 = vpop.f32.mrb[0].mxu0
        %v360 = vadd.f32 0.0, %v359
        %v361 = vpop.f32.mrb[0].mxu0
        %v362 = vpop.f32.mrb[0].mxu0
        %v363 = vadd.f32 0.0, %v362
        %v364 = vpop.f32.mrb[0].mxu0
        %365 = vmatprep.mubr.bf16.mxu0 %v248
        %366 = vmatmul.mubr.bf16.gmra.mrb[0].mxu0 %v247
        %v367 = vpop.f32.mrb[0].mxu0
        %v368 = vadd.f32 0.0, %v367
        %v369 = vpop.f32.mrb[0].mxu0
        %v370 = vpop.f32.mrb[0].mxu0
        %v371 = vadd.f32 0.0, %v370
        %v372 = vpop.f32.mrb[0].mxu0
        %373 = vmatprep.mubr.bf16.mxu0 %v250
        %374 = vmatmul.mubr.bf16.gmra.mrb[0].mxu0 %v249
        %v375 = vpop.f32.mrb[0].mxu0
        %v376 = vadd.f32 0.0, %v375
        %v377 = vpop.f32.mrb[0].mxu0
        %v378 = vpop.f32.mrb[0].mxu0
        %v379 = vadd.f32 0.0, %v378
        %v380 = vpop.f32.mrb[0].mxu0
        %381 = vmatprep.mubr.bf16.mxu0 %v252
        %382 = vmatmul.mubr.bf16.gmra.mrb[0].mxu0 %v251
        %v383 = vpop.f32.mrb[0].mxu0
        %v384 = vadd.f32 0.0, %v383
        %v385 = vpop.f32.mrb[0].mxu0
        %v386 = vpop.f32.mrb[0].mxu0
        %v387 = vadd.f32 0.0, %v386
        %v388 = vpop.f32.mrb[0].mxu0
        %389 = vmatprep.mubr.bf16.mxu0 %v254
        %390 = vmatmul.mubr.bf16.gmra.mrb[0].mxu0 %v253
        %v391 = vpop.f32.mrb[0].mxu0
        %v392 = vadd.f32 0.0, %v391
        %v393 = vpop.f32.mrb[0].mxu0
        %v394 = vpop.f32.mrb[0].mxu0
        %v395 = vadd.f32 0.0, %v394
        %v396 = vpop.f32.mrb[0].mxu0
        %397 = vmatprep.mubr.bf16.mxu0 %v256
        %398 = vmatmul.mubr.bf16.gmra.mrb[0].mxu0 %v255
        %v399 = vpop.f32.mrb[0].mxu0
        %v400 = vadd.f32 0.0, %v399
        %v401 = vpop.f32.mrb[0].mxu0
        %v402 = vpop.f32.mrb[0].mxu0
        %v403 = vadd.f32 0.0, %v402
        %v404 = vpop.f32.mrb[0].mxu0
        %405 = vmatprep.mubr.bf16.mxu0 %v258
        %406 = vmatmul.mubr.bf16.gmra.mrb[0].mxu0 %v257
        %v407 = vpop.f32.mrb[0].mxu0
        %v408 = vadd.f32 0.0, %v407
        %v409 = vpop.f32.mrb[0].mxu0
        %v410 = vpop.f32.mrb[0].mxu0
        %v411 = vadd.f32 0.0, %v410
        %v412 = vpop.f32.mrb[0].mxu0
        %413 = vmatprep.mubr.bf16.mxu0 %v260
        %414 = vmatmul.mubr.bf16.gmra.mrb[0].mxu0 %v259
        %v415 = vpop.f32.mrb[0].mxu0
        %v416 = vadd.f32 0.0, %v415
        %v417 = vpop.f32.mrb[0].mxu0
        %v418 = vpop.f32.mrb[0].mxu0
        %v419 = vadd.f32 0.0, %v418
        %v420 = vpop.f32.mrb[0].mxu0
        %421 = vmatprep.mubr.bf16.mxu0 %v262
        %422 = vmatmul.mubr.bf16.gmra.mrb[0].mxu0 %v261
        %v423 = vpop.f32.mrb[0].mxu0
        %v424 = vadd.f32 0.0, %v423
        %v425 = vpop.f32.mrb[0].mxu0
        %v426 = vpop.f32.mrb[0].mxu0
        %v427 = vadd.f32 0.0, %v426
        %v428 = vpop.f32.mrb[0].mxu0
        %429 = vmatprep.mubr.bf16.mxu0 %v264
        %430 = vmatmul.mubr.bf16.gmra.mrb[0].mxu0 %v263
        %v431 = vpop.f32.mrb[0].mxu0
        %v432 = vadd.f32 0.0, %v431
        %v433 = vpop.f32.mrb[0].mxu0
        %v434 = vpop.f32.mrb[0].mxu0
        %v435 = vadd.f32 0.0, %v434
        %v436 = vpop.f32.mrb[0].mxu0
        %437 = vmatprep.mubr.bf16.mxu0 %v266
        %438 = vmatmul.mubr.bf16.gmra.mrb[0].mxu0 %v265
        %v439 = vpop.f32.mrb[0].mxu0
        %v440 = vadd.f32 0.0, %v439
        %v441 = vpop.f32.mrb[0].mxu0
        %v442 = vpop.f32.mrb[0].mxu0
        %v443 = vadd.f32 0.0, %v442
        %v444 = vpop.f32.mrb[0].mxu0
        %445 = vmatprep.mubr.bf16.mxu0 %v268
        %446 = vmatmul.mubr.bf16.gmra.mrb[0].mxu0 %v267
        %v447 = vpop.f32.mrb[0].mxu0
        %v448 = vadd.f32 0.0, %v447
        %v449 = vpop.f32.mrb[0].mxu0
        %v450 = vpop.f32.mrb[0].mxu0
        %v451 = vadd.f32 0.0, %v450
        %v452 = vpop.f32.mrb[0].mxu0
        %453 = vmatprep.mubr.bf16.mxu0 %v270
        %454 = vmatmul.mubr.bf16.gmra.mrb[0].mxu0 %v269
        %v455 = vpop.f32.mrb[0].mxu0
        %v456 = vadd.f32 0.0, %v455
        %v457 = vpop.f32.mrb[0].mxu0
        %v458 = vpop.f32.mrb[0].mxu0
        %v459 = vadd.f32 0.0, %v458
        %v460 = vpop.f32.mrb[0].mxu0
        %461 = vmatprep.mubr.bf16.mxu0 %v272
        %462 = vmatmul.mubr.bf16.gmra.mrb[0].mxu0 %v271
        %v463 = vpop.f32.mrb[0].mxu0
        %v464 = vadd.f32 0.0, %v463
        %v465 = vpop.f32.mrb[0].mxu0
        %v466 = vpop.f32.mrb[0].mxu0
        %v467 = vadd.f32 0.0, %v466
        %v468 = vpop.f32.mrb[0].mxu0
        %469 = vmatprep.mubr.bf16.mxu0 %v274
        %470 = vmatmul.mubr.bf16.gmra.mrb[0].mxu0 %v273
        %v471 = vpop.f32.mrb[0].mxu0
        %v472 = vadd.f32 0.0, %v471
        %v473 = vpop.f32.mrb[0].mxu0
        %v474 = vpop.f32.mrb[0].mxu0
        %v475 = vadd.f32 0.0, %v474
        %v476 = vpop.f32.mrb[0].mxu0
        %477 = vmatprep.mubr.bf16.mxu0 %v276
        %478 = vmatmul.mubr.bf16.gmra.mrb[0].mxu0 %v275
        %v479 = vpop.f32.mrb[0].mxu0
        %v480 = vadd.f32 0.0, %v479
        %v481 = vpop.f32.mrb[0].mxu0
        %v482 = vpop.f32.mrb[0].mxu0
        %v483 = vadd.f32 0.0, %v482
        %v484 = vpop.f32.mrb[0].mxu0
        %485 = vdwg.mxu0
        %v486 = vpack.c.bf16 %v363, %v360
        %v487 = vpack.c.bf16 %v371, %v368
        %v488 = vpack.c.bf16 %v379, %v376
        %v489 = vpack.c.bf16 %v387, %v384
        %v490 = vpack.c.bf16 %v395, %v392
        %v491 = vpack.c.bf16 %v403, %v400
        %v492 = vpack.c.bf16 %v411, %v408
        %v493 = vpack.c.bf16 %v419, %v416
        %v494 = vpack.c.bf16 %v427, %v424
        %v495 = vpack.c.bf16 %v435, %v432
        %v496 = vpack.c.bf16 %v443, %v440
        %v497 = vpack.c.bf16 %v451, %v448
        %v498 = vpack.c.bf16 %v459, %v456
        %v499 = vpack.c.bf16 %v467, %v464
        %v500 = vpack.c.bf16 %v475, %v472
        %v501 = vpack.c.bf16 %v483, %v480
        %v518 = vunpack.c.l.b16 %v486
        %v519 = vunpack.c.h.b16 %v486
        %v520 = vunpack.c.l.b16 %v487
        %v521 = vunpack.c.h.b16 %v487
        %v522 = vunpack.c.l.b16 %v488
        %v523 = vunpack.c.h.b16 %v488
        %v524 = vunpack.c.l.b16 %v489
        %v525 = vunpack.c.h.b16 %v489
        %v526 = vunpack.c.l.b16 %v490
        %v527 = vunpack.c.h.b16 %v490
        %v528 = vunpack.c.l.b16 %v491
        %v529 = vunpack.c.h.b16 %v491
        %v530 = vunpack.c.l.b16 %v492
        %v531 = vunpack.c.h.b16 %v492
        %v532 = vunpack.c.l.b16 %v493
        %v533 = vunpack.c.h.b16 %v493
        %v534 = vunpack.c.l.b16 %v494
        %v535 = vunpack.c.h.b16 %v494
        %v536 = vunpack.c.l.b16 %v495
        %v537 = vunpack.c.h.b16 %v495
        %v538 = vunpack.c.l.b16 %v496
        %v539 = vunpack.c.h.b16 %v496
        %v540 = vunpack.c.l.b16 %v497
        %v541 = vunpack.c.h.b16 %v497
        %v542 = vunpack.c.l.b16 %v498
        %v543 = vunpack.c.h.b16 %v498
        %v544 = vunpack.c.l.b16 %v499
        %v545 = vunpack.c.h.b16 %v499
        %v546 = vunpack.c.l.b16 %v500
        %v547 = vunpack.c.h.b16 %v500
        %v548 = vunpack.c.l.b16 %v501
        %v549 = vunpack.c.h.b16 %v501
        %v550 = vpack.c.b16 %v518, %v518
        %v551 = vpack.c.b16 %v519, %v519
        %v552 = vpack.c.b16 %v520, %v520
        %v553 = vpack.c.b16 %v521, %v521
        %v554 = vpack.c.b16 %v522, %v522
        %v555 = vpack.c.b16 %v523, %v523
        %v556 = vpack.c.b16 %v524, %v524
        %v557 = vpack.c.b16 %v525, %v525
        %v558 = vpack.c.b16 %v526, %v526
        %v559 = vpack.c.b16 %v527, %v527
        %v560 = vpack.c.b16 %v528, %v528
        %v561 = vpack.c.b16 %v529, %v529
        %v562 = vpack.c.b16 %v530, %v530
        %v563 = vpack.c.b16 %v531, %v531
        %v564 = vpack.c.b16 %v532, %v532
        %v565 = vpack.c.b16 %v533, %v533
        %v566 = vpack.c.b16 %v534, %v534
        %v567 = vpack.c.b16 %v535, %v535
        %v568 = vpack.c.b16 %v536, %v536
        %v569 = vpack.c.b16 %v537, %v537
        %v570 = vpack.c.b16 %v538, %v538
        %v571 = vpack.c.b16 %v539, %v539
        %v572 = vpack.c.b16 %v540, %v540
        %v573 = vpack.c.b16 %v541, %v541
        %v574 = vpack.c.b16 %v542, %v542
        %v575 = vpack.c.b16 %v543, %v543
        %v576 = vpack.c.b16 %v544, %v544
        %v577 = vpack.c.b16 %v545, %v545
        %v578 = vpack.c.b16 %v546, %v546
        %v579 = vpack.c.b16 %v547, %v547
        %v580 = vpack.c.b16 %v548, %v548
        %v581 = vpack.c.b16 %v549, %v549
        %614 = vst [vmem:[%s177] sm:$0xf] %v550
        %615 = vst [vmem:[%s177 + $0x4] sm:$0xf] %v551
        %616 = vst [vmem:[%s177 + $0x8] sm:$0xf] %v552
        %617 = vst [vmem:[%s177 + $0xc] sm:$0xf] %v553
        %618 = vst [vmem:[%s177 + $0x10] sm:$0xf] %v554
        %619 = vst [vmem:[%s177 + $0x14] sm:$0xf] %v555
        %620 = vst [vmem:[%s177 + $0x18] sm:$0xf] %v556
        %621 = vst [vmem:[%s177 + $0x1c] sm:$0xf] %v557
        %622 = vst [vmem:[%s177 + $0x20] sm:$0xf] %v558
        %623 = vst [vmem:[%s177 + $0x24] sm:$0xf] %v559
        %624 = vst [vmem:[%s177 + $0x28] sm:$0xf] %v560
        %625 = vst [vmem:[%s177 + $0x2c] sm:$0xf] %v561
        %626 = vst [vmem:[%s177 + $0x30] sm:$0xf] %v562
        %627 = vst [vmem:[%s177 + $0x34] sm:$0xf] %v563
        %628 = vst [vmem:[%s177 + $0x38] sm:$0xf] %v564
        %629 = vst [vmem:[%s177 + $0x3c] sm:$0xf] %v565
        %630 = vst [vmem:[%s177 + $0x40] sm:$0xf] %v566
        %631 = vst [vmem:[%s177 + $0x44] sm:$0xf] %v567
        %632 = vst [vmem:[%s177 + $0x48] sm:$0xf] %v568
        %633 = vst [vmem:[%s177 + $0x4c] sm:$0xf] %v569
        %634 = vst [vmem:[%s177 + $0x50] sm:$0xf] %v570
        %635 = vst [vmem:[%s177 + $0x54] sm:$0xf] %v571
        %636 = vst [vmem:[%s177 + $0x58] sm:$0xf] %v572
        %637 = vst [vmem:[%s177 + $0x5c] sm:$0xf] %v573
        %638 = vst [vmem:[%s177 + $0x60] sm:$0xf] %v574
        %639 = vst [vmem:[%s177 + $0x64] sm:$0xf] %v575
        %640 = vst [vmem:[%s177 + $0x68] sm:$0xf] %v576
        %641 = vst [vmem:[%s177 + $0x6c] sm:$0xf] %v577
        %642 = vst [vmem:[%s177 + $0x70] sm:$0xf] %v578
        %643 = vst [vmem:[%s177 + $0x74] sm:$0xf] %v579
        %644 = vst [vmem:[%s177 + $0x78] sm:$0xf] %v580
        %645 = vst [vmem:[%s177 + $0x7c] sm:$0xf] %v581
        %s646 = sand.u32 %s75, 1
        %s647 = scalar_lea.sflag [#allocation4], %s646
        %s648 = sand.u32 %s75, 1
        %s649 = smul.addr %s648, 128
        %s650 = scalar_lea.vmem [#allocation7], %s649
        // Predicated region
        $region37: #{tpu_custom_call.1} parent=27 // pred_check
          %p651 = pneg %p85
        $region38: #{tpu_custom_call.1} parent=27 // pred_check_branch
          %653 = sbr.rel (%p651) target = $region40
        $region39: #{tpu_custom_call.1} parent=27 // pred_region
          %s654 = smul.u32 32, %s20
          %s656 = ssub.s32 2048, 2048
          %657 = vsyncadd %s647, %s656
          %s658 = smul.addr %s654, 64
          %s659 = scalar_lea.hbm %s2, %s658
          %s660 = sshll.u32 %s650, 4
          %s661 = int_to_ptr.vmem [resolvable:$true] %s660
          %666 = dma.vmem_to_hbm [thread:$0]  %s661, 2048, %s659, %s647, 64, 64, 4
        $region40: #{tpu_custom_call.1} parent=27 // pred_fallthru
          _
      $region28: #{tpu_custom_call.1} parent=5 // pred_fallthru
        _
      %p667 = scmp.le.s32.totalorder 2, %s15
      // Predicated region
      $region41: #{tpu_custom_call.1} parent=5 // pred_check
        %p668 = pneg %p667
      $region42: #{tpu_custom_call.1} parent=5 // pred_check_branch
        %670 = sbr.rel (%p668) target = $region44
      $region43: #{tpu_custom_call.1} parent=5 // pred_region
        %s671 = ssub.s32 %s15, 2
        // Predicated region
        $region45: #{tpu_custom_call.1} parent=43 // pred_check
          %p672 = pneg %p91
        $region46: #{tpu_custom_call.1} parent=43 // pred_check_branch
          %674 = sbr.rel (%p672) target = $region48
        $region47: #{tpu_custom_call.1} parent=43 // pred_region
          %s675 = sand.u32 %s76, 1
          %s676 = scalar_lea.sflag [#allocation4], %s675
          %s677 = sand.u32 %s76, 1
          %s678 = smul.addr %s677, 128
          %s679 = scalar_lea.vmem [#allocation7], %s678
          %680 = dma.done %s676, 2048
        $region48: #{tpu_custom_call.1} parent=43 // pred_fallthru
          _
      $region44: #{tpu_custom_call.1} parent=5 // pred_fallthru
        _
    $region6: #{tpu_custom_call.1} parent=1 // loop_footer
      %s19 = sadd.s32 1, %s15
    $region7: #{tpu_custom_call.1} parent=1 // loop_footer_branch
      %14 = sbr.rel target = $region3
    $region8: #{tpu_custom_call.1} parent=1 // loop_exit
      _
    %681 = vsyncpa [#allocation3], 1
    %s682 = scalar_lea.sflag [#allocation3], 1
    %683 = vsyncpa %s682, 1
    %684 = vsyncpa [#allocation6], 1
    %685 = vsyncpa [#allocation4], 1
    %s686 = scalar_lea.sflag [#allocation4], 1
    %687 = vsyncpa %s686, 1

</llo_original>
